<compile_context>
chip_gen: v5e
topology: v5e:2x2
jax: 0.10.0
libtpu: 0.0.40
codegen_flags: <defaults>
</compile_context>

<pallas_src>
import functools

import jax
import jax.numpy as jnp
from jax.experimental import pallas as pl
from jax.experimental.pallas import tpu as pltpu


_MAX_ROW_TILE = 1024  # 1024 rows x 128 lanes x f32 = 512 KiB -> trivially fits VMEM


def _mlp_kernel(x_ref, w1_ref, b1_ref, w2_ref, b2_ref, o_ref):
    """Fused: o = relu(x @ W1 + b1) @ W2 + b2, all in VMEM/f32 accumulation.

    x_ref:  (tm, Ip)
    w1_ref: (Ip, Hp),  b1_ref: (1, Hp)   (f32)
    w2_ref: (Hp, Op),  b2_ref: (1, Op)   (f32)
    o_ref:  (tm, Op)   (Op is lane-dense: 128 on the paired path)
    """
    h = jnp.dot(x_ref[...], w1_ref[...], preferred_element_type=jnp.float32)
    h = jnp.maximum(h + b1_ref[...], 0.0)                      # Linear1 + ReLU
    y = jnp.dot(h.astype(w2_ref.dtype), w2_ref[...],
                preferred_element_type=jnp.float32) + b2_ref[...]
    o_ref[...] = y.astype(o_ref.dtype)


def _pairing_factor(m, o):
    """How many consecutive rows to pack into one so the stored row is >=128 wide."""
    pair = 1
    while o * pair < 128 and m % (pair * 2) == 0:
        pair *= 2
    return pair


def _choose_row_tiling(m):
    """Return (row_tile, padded_rows).

    * Tiles are multiples of 8 (sublane granularity), capped at _MAX_ROW_TILE.
    * Keeps the grid length >= 2 once m is large enough (v7x megacore sharding).
    * Awkward m is padded with zero rows rather than using one huge
      full-extent block (keeps pipelining + VMEM bounded).
    """
    if m < 16:
        return m, m  # one tiny full-extent block; splitting only adds overhead
    n_blocks = max(2, pl.cdiv(m, _MAX_ROW_TILE))
    tm = pl.cdiv(pl.cdiv(m, n_blocks), 8) * 8
    return tm, tm * n_blocks


def _mlp_forward_2d(x2d, w1, b1, w2, b2, use_bf16=False):
    """x2d: (M, I) -> (M, O) via one fused pallas_call."""
    M, I = x2d.shape
    O = w2.shape[-1]

    # --- lane-dense output packing (free row-major repack in the wrapper) -----
    pair = _pairing_factor(M, O)
    if pair > 1:
        x2d = x2d.reshape(M // pair, pair * I)          # row r = [x[p*r], ..., x[p*r+p-1]]
        eye = jnp.eye(pair, dtype=w1.dtype)
        w1 = jnp.kron(eye, w1)                          # block-diag (pair*I, pair*H)
        w2 = jnp.kron(eye, w2)                          # block-diag (pair*H, pair*O)
        b1 = jnp.tile(b1, (1, pair))
        b2 = jnp.tile(b2, (1, pair))

    Mp, Ip = x2d.shape
    Hp = w1.shape[-1]
    Op = w2.shape[-1]

    # --- row tiling (big tiles, >=2 grid steps when large, pad awkward M) -----
    tm, m_pad = _choose_row_tiling(Mp)
    if m_pad != Mp:
        x2d = jnp.pad(x2d, ((0, m_pad - Mp), (0, 0)))

    mm_dtype = jnp.bfloat16 if use_bf16 else x2d.dtype
    x_in = x2d.astype(mm_dtype)
    w1_in = w1.astype(mm_dtype)
    w2_in = w2.astype(mm_dtype)
    b1_in = b1.astype(jnp.float32)
    b2_in = b2.astype(jnp.float32)

    grid_spec = pltpu.PrefetchScalarGridSpec(
        num_scalar_prefetch=0,
        grid=(m_pad // tm,),
        in_specs=[
            pl.BlockSpec((tm, Ip), lambda i: (i, 0)),
            pl.BlockSpec((Ip, Hp), lambda i: (0, 0)),   # weights: constant index map,
            pl.BlockSpec((1, Hp), lambda i: (0, 0)),    # VMEM-resident across the grid
            pl.BlockSpec((Hp, Op), lambda i: (0, 0)),
            pl.BlockSpec((1, Op), lambda i: (0, 0)),
        ],
        out_specs=pl.BlockSpec((tm, Op), lambda i: (i, 0)),
    )

    out = pl.pallas_call(
        _mlp_kernel,
        grid_spec=grid_spec,
        out_shape=jax.ShapeDtypeStruct((m_pad, Op), jnp.float32),
        compiler_params=pltpu.CompilerParams(
            dimension_semantics=("parallel",),        # rows are independent -> megacore
            vmem_limit_bytes=32 * 1024 * 1024,        # insurance; actual use ~1 MiB
        ),
    )(x_in, w1_in, b1_in, w2_in, b2_in)

    if m_pad != Mp:
        out = out[:Mp]
    if pair > 1:
        out = out.reshape(M, O)                       # undo the free row-major pairing
    return out


@functools.partial(jax.jit, static_argnames=("use_bf16",))
def encoder_simple_forward(x, hidden, params, *, use_bf16=False):
    """EncoderSimple.forward.

    x:      (2, T, input_size)  -- dim 0 must be 2 (PyTorch forward unpacks it)
    hidden: ignored (the module overwrites it), kept for interface parity
    params: (w1 (I,H), b1 (1,H), w2 (H,64), b2 (1,64))
    returns (output, hidden) = (y[0], y[1]) where y = MLP(x)
    """
    del hidden  # unused by the module's forward
    w1, b1, w2, b2 = params
    lead = x.shape[:-1]
    I = x.shape[-1]
    O = w2.shape[-1]

    m = 1
    for d in lead:
        m *= d
    x2d = x.reshape(m, I)                 # free row-major reshape, no transpose
    y = _mlp_forward_2d(x2d, w1, b1, w2, b2, use_bf16=use_bf16).reshape(*lead, O)

    # `output, hidden = self.simple(input)` unpacks along dim 0 (size must be 2).
    return y[0], y[1]


def init_params(key, input_size, hidden_size, out_size=64):
    """PyTorch nn.Linear default init: uniform(-1/sqrt(fan_in), 1/sqrt(fan_in))."""
    k1a, k1b, k2a, k2b = jax.random.split(key, 4)
    lim1 = 1.0 / jnp.sqrt(jnp.float32(input_size))
    lim2 = 1.0 / jnp.sqrt(jnp.float32(hidden_size))
    w1 = jax.random.uniform(k1a, (input_size, hidden_size), jnp.float32, -lim1, lim1)
    b1 = jax.random.uniform(k1b, (1, hidden_size), jnp.float32, -lim1, lim1)
    w2 = jax.random.uniform(k2a, (hidden_size, out_size), jnp.float32, -lim2, lim2)
    b2 = jax.random.uniform(k2b, (1, out_size), jnp.float32, -lim2, lim2)
    return (w1, b1, w2, b2)


if __name__ == "__main__":
    # Small shapes consistent with the module's forward:
    batch_size = 2          # must be 2: forward unpacks the result along dim 0
    seq_len = 8
    input_size = 4
    hidden_size = 32
    num_grulstm_layers = 2  # only used by init_hidden(); forward ignores hidden
    out_size = 64           # second Linear's fixed output width

    key = jax.random.PRNGKey(0)
    key, kx = jax.random.split(key)
    x = jax.random.normal(kx, (batch_size, seq_len, input_size), jnp.float32)

    # init_hidden(): zeros of shape (num_layers, batch, hidden) — unused by forward.
    h0 = jnp.zeros((num_grulstm_layers, batch_size, hidden_size), jnp.float32)

    params = init_params(key, input_size, hidden_size, out_size)

    output, hidden = encoder_simple_forward(x, h0, params)
    jax.block_until_ready((output, hidden))

    assert output.shape == (seq_len, out_size)
    assert hidden.shape == (seq_len, out_size)

    # Reference check against plain XLA (same math, same params, f32 path).
    y_ref = jnp.maximum(x.reshape(-1, input_size) @ params[0] + params[1], 0.0)
    y_ref = (y_ref @ params[2] + params[3]).reshape(batch_size, seq_len, out_size)
    assert jnp.allclose(output, y_ref[0], atol=1e-5, rtol=1e-5)
    assert jnp.allclose(hidden, y_ref[1], atol=1e-5, rtol=1e-5)

    print("KERNEL_OK")
</pallas_src>

<mosaic_0001>
module attributes {stable_mosaic.version = 11 : i64} {
  func.func @_mlp_kernel(%arg0: i32, %arg1: memref<8x8xf32, #tpu.memory_space<vmem>>, %arg2: memref<8x64xf32, #tpu.memory_space<vmem>>, %arg3: memref<1x64xf32, #tpu.memory_space<vmem>>, %arg4: memref<64x128xf32, #tpu.memory_space<vmem>>, %arg5: memref<1x128xf32, #tpu.memory_space<vmem>>, %arg6: memref<8x128xf32, #tpu.memory_space<vmem>>) attributes {dimension_semantics = [#tpu.dimension_semantics<parallel>], iteration_bounds = array<i64: 1>, scalar_prefetch = 0 : i64, scratch_operands = 0 : i64, tpu.core_type = #tpu.core_type<tc>, window_params = [{transform_indices = @transform_0, window_bounds = array<i64: 8, 8>}, {pipeline_mode = #tpu.pipeline_mode<synchronous>, transform_indices = @transform_1, window_bounds = array<i64: 8, 64>}, {pipeline_mode = #tpu.pipeline_mode<synchronous>, transform_indices = @transform_2, window_bounds = array<i64: 1, 64>}, {pipeline_mode = #tpu.pipeline_mode<synchronous>, transform_indices = @transform_3, window_bounds = array<i64: 64, 128>}, {pipeline_mode = #tpu.pipeline_mode<synchronous>, transform_indices = @transform_4, window_bounds = array<i64: 1, 128>}, {transform_indices = @transform_5, window_bounds = array<i64: 8, 128>}]} {
    %c0 = arith.constant 0 : index
    %c0_0 = arith.constant 0 : index
    %0 = vector.load %arg1[%c0, %c0_0] : memref<8x8xf32, #tpu.memory_space<vmem>>, vector<8x8xf32>
    %c0_1 = arith.constant 0 : index
    %c0_2 = arith.constant 0 : index
    %1 = vector.load %arg2[%c0_1, %c0_2] : memref<8x64xf32, #tpu.memory_space<vmem>>, vector<8x64xf32>
    %cst = arith.constant dense<0.000000e+00> : vector<8x64xf32>
    %2 = tpu.matmul %0, %1, %cst {dimension_numbers = #tpu.dot_dimension_numbers<[1], [0], [0], [1], [0, 0, 1, 1], [], []>} : vector<8x8xf32>, vector<8x64xf32>, vector<8x64xf32> -> vector<8x64xf32>
    %c0_3 = arith.constant 0 : index
    %c0_4 = arith.constant 0 : index
    %3 = vector.load %arg3[%c0_3, %c0_4] : memref<1x64xf32, #tpu.memory_space<vmem>>, vector<1x64xf32>
    %4 = vector.broadcast %3 : vector<1x64xf32> to vector<8x64xf32>
    %5 = arith.addf %2, %4 : vector<8x64xf32>
    %cst_5 = arith.constant 0.000000e+00 : f32
    %6 = vector.broadcast %cst_5 : f32 to vector<8x64xf32>
    %7 = arith.maximumf %5, %6 : vector<8x64xf32>
    %c0_6 = arith.constant 0 : index
    %c0_7 = arith.constant 0 : index
    %8 = vector.load %arg4[%c0_6, %c0_7] : memref<64x128xf32, #tpu.memory_space<vmem>>, vector<64x128xf32>
    %cst_8 = arith.constant dense<0.000000e+00> : vector<8x128xf32>
    %9 = tpu.matmul %7, %8, %cst_8 {dimension_numbers = #tpu.dot_dimension_numbers<[1], [0], [0], [1], [0, 0, 1, 1], [], []>} : vector<8x64xf32>, vector<64x128xf32>, vector<8x128xf32> -> vector<8x128xf32>
    %c0_9 = arith.constant 0 : index
    %c0_10 = arith.constant 0 : index
    %10 = vector.load %arg5[%c0_9, %c0_10] : memref<1x128xf32, #tpu.memory_space<vmem>>, vector<1x128xf32>
    %11 = vector.broadcast %10 : vector<1x128xf32> to vector<8x128xf32>
    %12 = arith.addf %9, %11 : vector<8x128xf32>
    %c0_11 = arith.constant 0 : index
    %c0_12 = arith.constant 0 : index
    %13 = vector.load %arg6[%c0_11, %c0_12] : memref<8x128xf32, #tpu.memory_space<vmem>>, vector<8x128xf32>
    tpu.vector_store %arg6[%c0_11, %c0_12], %12 {strides = array<i32>} : memref<8x128xf32, #tpu.memory_space<vmem>>, vector<8x128xf32>,
    return
  }
  func.func @transform_0(%arg0: i32) -> (i32, i32) {
    %c0_i32 = arith.constant 0 : i32
    %c0_i32_0 = arith.constant 0 : i32
    return %arg0, %c0_i32 : i32, i32
  }
  func.func @transform_1(%arg0: i32) -> (i32, i32) {
    %c0_i32 = arith.constant 0 : i32
    %c0_i32_0 = arith.constant 0 : i32
    %c0_i32_1 = arith.constant 0 : i32
    return %c0_i32, %c0_i32_0 : i32, i32
  }
  func.func @transform_2(%arg0: i32) -> (i32, i32) {
    %c0_i32 = arith.constant 0 : i32
    %c0_i32_0 = arith.constant 0 : i32
    %c0_i32_1 = arith.constant 0 : i32
    return %c0_i32, %c0_i32_0 : i32, i32
  }
  func.func @transform_3(%arg0: i32) -> (i32, i32) {
    %c0_i32 = arith.constant 0 : i32
    %c0_i32_0 = arith.constant 0 : i32
    %c0_i32_1 = arith.constant 0 : i32
    return %c0_i32, %c0_i32_0 : i32, i32
  }
  func.func @transform_4(%arg0: i32) -> (i32, i32) {
    %c0_i32 = arith.constant 0 : i32
    %c0_i32_0 = arith.constant 0 : i32
    %c0_i32_1 = arith.constant 0 : i32
    return %c0_i32, %c0_i32_0 : i32, i32
  }
  func.func @transform_5(%arg0: i32) -> (i32, i32) {
    %c0_i32 = arith.constant 0 : i32
    %c0_i32_0 = arith.constant 0 : i32
    return %arg0, %c0_i32 : i32, i32
  }
}

</mosaic_0001>

<llo_original>
// kernel: squeeze.2
$region0: #{squeeze.2}
  %s0 = inlined_call_operand.vmem [shape: f32[4,128], index: 0, kind: input, shape index: {}]
  %s1 = inlined_call_operand.hbm [shape: f32[8,64], index: 1, kind: output, shape index: {}]
  $region1: #{squeeze.2} parent=0
    #allocation0 [shape = 'u8[4096]{0}', space=vmem, size = 0x1000, scoped, tag = 'operand span for operand 1']
    #allocation1 [shape = 's32[1]{0}', space=sflag, size = 0x4, scoped, tag = 'scoped memory for squeeze.2']
    #allocation2 [shape = 'u8[4096]{0}', space=vmem, size = 0x1000, scoped, tag = 'scoped mem for input reshape']
    %2 = vsyncpa [#allocation1], 0
    %s4 = ssub.s32 16, 1
    %v5 = vld [vmem:[%s0] sm:%s4]
    %6 = vst [vmem:[#allocation2] sm:%s4] %v5
    %v7 = vld [vmem:[#allocation2] sm:$0xf]
    %vm8 = vcmask 523264
    %9 = vst.msk [vmem:[#allocation0] ss:$2 sm:$0xf] %vm8, %v7
    %v10 = vld [vmem:[#allocation2] sm:$0xf]
    %11 = vrot.lane.b32.xlu0 %v10, 64
    %v12 = vpop.permute.xlu0 %11
    %vm13 = vcmask 523264
    %s14 = scalar_lea.vmem [#allocation0], 1
    %15 = vst.msk [vmem:[%s14] ss:$2 sm:$0xf] %vm13, %v12
    %17 = vsyncadd [#allocation1], 0
    %s19 = sshll.u32 [#allocation0], 4
    %s20 = int_to_ptr.vmem [resolvable:$true] %s19
    %s21 = sshll.u32 %s1, 4
    %s22 = int_to_ptr.hbm [resolvable:$true] %s21
    %24 = dma.vmem_to_hbm [thread:$0]  %s20, 128, %s22, [#allocation1]
    %26 = dma.done [#allocation1], 128
    %27 = vsyncpa [#allocation1], 1

// kernel: encoder_simple_forward.1
$region0: #{encoder_simple_forward.1}
  #allocation0 [shape = 'u32[]', space=smem, size = 0x4, offset = 0x4, fixed_abs, tag = 'smem constant byte address 0x4 - core index']
  #allocation1 [shape = 'u32[72,128]{1,0:T(1,128)}', space=vmem, size = 0x9000, scoped, tag = 'internal scratch']
  %s0 = inlined_call_operand.vmem [shape: f32[8,8], index: 0, kind: input, shape index: {}]
  %s1 = inlined_call_operand.vmem [shape: f32[8,64], index: 1, kind: input, shape index: {}]
  %s2 = inlined_call_operand.vmem [shape: f32[1,64], index: 2, kind: input, shape index: {}]
  %s3 = inlined_call_operand.vmem [shape: f32[64,128], index: 3, kind: input, shape index: {}]
  %s4 = inlined_call_operand.vmem [shape: f32[1,128], index: 4, kind: input, shape index: {}]
  %s5 = inlined_call_operand.vmem [shape: f32[8,128], index: 5, kind: output, shape index: {}]
  %s6 = sld [smem:[#allocation0]]
  $region30: #{encoder_simple_forward.1} parent=0
    _
  %s8 = ssub.s32 1, %s6
  %s9 = scalar_select 0, %s8, %s6
  // Predicated region
  $region2: #{encoder_simple_forward.1} parent=0 // pred_check
    _
  $region3: #{encoder_simple_forward.1} parent=0 // pred_check_branch
    %11 = sbr.rel (0) target = $region5
  $region4: #{encoder_simple_forward.1} parent=0 // pred_region
    _
  $region5: #{encoder_simple_forward.1} parent=0 // pred_fallthru
    _
  // Predicated region
  $region6: #{encoder_simple_forward.1} parent=0 // pred_check
    _
  $region7: #{encoder_simple_forward.1} parent=0 // pred_check_branch
    %13 = sbr.rel (0) target = $region9
  $region8: #{encoder_simple_forward.1} parent=0 // pred_region
    _
  $region9: #{encoder_simple_forward.1} parent=0 // pred_fallthru
    _
  // Predicated region
  $region10: #{encoder_simple_forward.1} parent=0 // pred_check
    _
  $region11: #{encoder_simple_forward.1} parent=0 // pred_check_branch
    %15 = sbr.rel (0) target = $region13
  $region12: #{encoder_simple_forward.1} parent=0 // pred_region
    _
  $region13: #{encoder_simple_forward.1} parent=0 // pred_fallthru
    _
  // Predicated region
  $region14: #{encoder_simple_forward.1} parent=0 // pred_check
    _
  $region15: #{encoder_simple_forward.1} parent=0 // pred_check_branch
    %17 = sbr.rel (0) target = $region17
  $region16: #{encoder_simple_forward.1} parent=0 // pred_region
    _
  $region17: #{encoder_simple_forward.1} parent=0 // pred_fallthru
    _
  // Predicated region
  $region18: #{encoder_simple_forward.1} parent=0 // pred_check
    _
  $region19: #{encoder_simple_forward.1} parent=0 // pred_check_branch
    %19 = sbr.rel (0) target = $region21
  $region20: #{encoder_simple_forward.1} parent=0 // pred_region
    _
  $region21: #{encoder_simple_forward.1} parent=0 // pred_fallthru
    _
  %v20 = vld [vmem:[%s0] sm:$0xff]
  %v21 = vld [vmem:[%s1] sm:$0xff]
  %v22 = vld [vmem:[%s2] sm:$0x1]
  %v24 = vperm.slane %v22, 0
  %vm26 = vcmask 64512
  %v28 = vsel %vm26, %v20, 0
  %30 = vmatpush.msra.mxu0 0.0
  %31 = vmatpush.msra.mxu0 0.0
  %32 = vmatpush.msra.mxu0 0.0
  %33 = vmatpush.msra.mxu0 0.0
  %34 = vmatpush.msra.mxu0 0.0
  %35 = vmatpush.msra.mxu0 0.0
  %36 = vmatpush.msra.mxu0 0.0
  %37 = vmatpush.msra.mxu0 0.0
  %38 = vmatpush.msra.mxu0 0.0
  %39 = vmatpush.msra.mxu0 0.0
  %40 = vmatpush.msra.mxu0 0.0
  %41 = vmatpush.msra.mxu0 0.0
  %42 = vmatpush.msra.mxu0 0.0
  %43 = vmatpush.msra.mxu0 0.0
  %44 = vmatpush.msra.mxu0 0.0
  %45 = vmatpush.msra.mxu0 %v21
  %46 = vmatmul.f32.gmra.mxu0 %v28
  %v47 = vpop.f32.mrf.mxu0
  %v48 = vadd.f32 %v24, %v47
  %49 = vdwg.mxu0
  %v50 = vmax.f32 %v48, 0.0
  %v51 = vld [vmem:[%s3] sm:$0xff]
  %v52 = vld [vmem:[%s3 + $0x8] sm:$0xff]
  %v53 = vld [vmem:[%s3 + $0x10] sm:$0xff]
  %v54 = vld [vmem:[%s3 + $0x18] sm:$0xff]
  %v55 = vld [vmem:[%s3 + $0x20] sm:$0xff]
  %v56 = vld [vmem:[%s3 + $0x28] sm:$0xff]
  %v57 = vld [vmem:[%s3 + $0x30] sm:$0xff]
  %v58 = vld [vmem:[%s3 + $0x38] sm:$0xff]
  %v59 = vld [vmem:[%s4] sm:$0x1]
  %v61 = vperm.slane %v59, 0
  %vm63 = vcmask 523264
  %v65 = vsel %vm63, %v50, 0
  %67 = vmatpush.msra.mxu0 0.0
  %68 = vmatpush.msra.mxu0 0.0
  %69 = vmatpush.msra.mxu0 0.0
  %70 = vmatpush.msra.mxu0 0.0
  %71 = vmatpush.msra.mxu0 0.0
  %72 = vmatpush.msra.mxu0 0.0
  %73 = vmatpush.msra.mxu0 0.0
  %74 = vmatpush.msra.mxu0 0.0
  %75 = vmatpush.msra.mxu0 %v58
  %76 = vmatpush.msra.mxu0 %v57
  %77 = vmatpush.msra.mxu0 %v56
  %78 = vmatpush.msra.mxu0 %v55
  %79 = vmatpush.msra.mxu0 %v54
  %80 = vmatpush.msra.mxu0 %v53
  %81 = vmatpush.msra.mxu0 %v52
  %82 = vmatpush.msra.mxu0 %v51
  %83 = vmatmul.f32.gmra.mxu0 %v65
  %v84 = vpop.f32.mrf.mxu0
  %v85 = vadd.f32 %v61, %v84
  %86 = vdwg.mxu0
  %87 = vst [vmem:[%s5] sm:$0xff] %v85
  // Predicated region
  $region22: #{encoder_simple_forward.1} parent=0 // pred_check
    _
  $region23: #{encoder_simple_forward.1} parent=0 // pred_check_branch
    %89 = sbr.rel (0) target = $region25
  $region24: #{encoder_simple_forward.1} parent=0 // pred_region
    _
  $region25: #{encoder_simple_forward.1} parent=0 // pred_fallthru
    _
  // Predicated region
  $region26: #{encoder_simple_forward.1} parent=0 // pred_check
    _
  $region27: #{encoder_simple_forward.1} parent=0 // pred_check_branch
    %91 = sbr.rel (0) target = $region29
  $region28: #{encoder_simple_forward.1} parent=0 // pred_region
    _
  $region29: #{encoder_simple_forward.1} parent=0 // pred_fallthru
    _

</llo_original>
